<compile_context>
chip_gen: v6e
topology: v6e:2x2x1
jax: 0.10.0
libtpu: 0.0.40
codegen_flags: <defaults>
</compile_context>

<pallas_src>
import functools

import jax
import jax.numpy as jnp
from jax.experimental import pallas as pl
from jax.experimental.pallas import tpu as pltpu

NUM_CHANNELS = 4
LANE = 128          # lane-dense padding for the tiny class dimension
NEG_BIG = -1e30     # f32/bf16-safe "minus infinity" for padded class lanes
                    # (would overflow if the logits path ever moved to fp16)


def _round_up(x, m):
    return ((x + m - 1) // m) * m


def video_classifier_kernel(x_ref, w1_ref, b1_ref, w2_ref, b2_ref, out_ref):
    # x_ref  : (TB, 4*E)   f32   streamed features, one batch tile
    # w1_ref : (4*E, H)    bf16  fc1.weight^T with softmax(channel_weights) folded in
    # b1_ref : (1, H)      f32
    # w2_ref : (H, LANE)   bf16  fc2.weight^T zero-padded to 128 lanes
    # b2_ref : (1, LANE)   f32   fc2.bias; padded lanes = NEG_BIG
    # out_ref: (TB, LANE)  bf16

    # In-kernel bf16 cast of the streamed operand (no separate wrapper HBM pass).
    xb = x_ref[...].astype(jnp.bfloat16)

    # fc1 : single K = 4*E contraction on the MXU, f32 accumulation.
    h = jnp.dot(xb, w1_ref[...], preferred_element_type=jnp.float32)
    h = jnp.maximum(h + b1_ref[...], 0.0)                              # relu

    # fc2 (tiny, bf16 operands / f32 accumulate) + numerically-stable log_softmax.
    logits = jnp.dot(h.astype(jnp.bfloat16), w2_ref[...],
                     preferred_element_type=jnp.float32) + b2_ref[...]
    m = jnp.max(logits, axis=-1, keepdims=True)
    shifted = logits - m
    lse = jnp.log(jnp.sum(jnp.exp(shifted), axis=-1, keepdims=True))
    out_ref[...] = (shifted - lse).astype(out_ref.dtype)


@functools.partial(jax.jit, static_argnames=("block_batch",))
def video_classifier_forward(feats, channel_weight_logits, w1, b1, w2, b2,
                             *, block_batch=2048):
    """feats: (B, 4, E) float32 per-channel sentence embeddings."""
    B, C, E = feats.shape
    assert C == NUM_CHANNELS
    K = C * E
    H = b1.shape[-1]
    O = b2.shape[-1]

    # --- hoisted parameter prep (runs once, outside the batch loop) ----------
    # softmax over the 4 channel logits, folded into the fc1 weight blocks.
    w = jax.nn.softmax(channel_weight_logits.astype(jnp.float32))          # (4,)
    w1_folded = (w1.astype(jnp.float32).reshape(C, E, H)
                 * w[:, None, None]).reshape(K, H)
    w1_bf = w1_folded.astype(jnp.bfloat16)                                 # (K, H)
    b1_p = b1.astype(jnp.float32).reshape(1, H)

    # lane-dense (128-wide) fc2 in bf16: zero-pad weights, NEG_BIG-pad bias so
    # padded class lanes never win the max and contribute 0 to the softmax sum.
    w2_p = jnp.zeros((H, LANE), jnp.bfloat16).at[:, :O].set(
        w2.astype(jnp.bfloat16))
    b2_p = jnp.full((1, LANE), NEG_BIG, jnp.float32).at[0, :O].set(
        b2.astype(jnp.float32))

    # --- batch tiling ---------------------------------------------------------
    # Features are streamed in their native f32 (cast to bf16 inside the kernel)
    # so the wrapper never materializes an extra HBM copy. Pad only to a
    # multiple of 16 rows (sublane packing); the ragged last tile (if any) is
    # handled by Pallas' partial-block masking, never padded up to TB.
    x = feats.reshape(B, K).astype(jnp.float32)
    B_pad = _round_up(B, 16)
    if B_pad != B:
        x = jnp.pad(x, ((0, B_pad - B), (0, 0)))

    # Batch tile from a VMEM budget (double-buffered input/output tiles plus
    # the f32 intermediates and the resident weights), capped by block_batch.
    VMEM_BUDGET = 20 * 1024 * 1024          # leaves headroom under the 32 MiB limit
    bytes_per_row = (2 * K * 4              # double-buffered f32 feature tile
                     + 2 * LANE * 2         # double-buffered bf16 output tile
                     + H * 6                # h (f32) + bf16 copy
                     + 3 * LANE * 4)        # logits / shifted / exp f32 temps
    weight_bytes = K * H * 2 + H * LANE * 2 + (H + LANE) * 4
    tb_cap = max(16, (VMEM_BUDGET - weight_bytes) // bytes_per_row)
    TB = min(block_batch, tb_cap, B_pad)
    TB = max(16, (TB // 16) * 16)
    grid = (pl.cdiv(B_pad, TB),)

    cost = pl.CostEstimate(
        flops=2 * B_pad * (K * H + H * LANE),
        transcendentals=B_pad * LANE,                                      # exp
        bytes_accessed=(B_pad * K * 4                                      # f32 feats in
                        + w1_bf.size * 2 + w2_p.size * 2
                        + (b1_p.size + b2_p.size) * 4
                        + B_pad * LANE * 2),                               # bf16 out
    )

    out_padded = pl.pallas_call(
        video_classifier_kernel,
        out_shape=jax.ShapeDtypeStruct((B_pad, LANE), jnp.bfloat16),
        grid=grid,
        in_specs=[
            pl.BlockSpec((TB, K), lambda i: (i, 0)),     # streamed features
            pl.BlockSpec((K, H), lambda i: (0, 0)),      # resident weights
            pl.BlockSpec((1, H), lambda i: (0, 0)),
            pl.BlockSpec((H, LANE), lambda i: (0, 0)),
            pl.BlockSpec((1, LANE), lambda i: (0, 0)),
        ],
        out_specs=pl.BlockSpec((TB, LANE), lambda i: (i, 0)),
        compiler_params=pltpu.CompilerParams(
            dimension_semantics=("parallel",),
            vmem_limit_bytes=32 * 1024 * 1024),
        cost_estimate=cost,
    )(x, w1_bf, b1_p, w2_p, b2_p)

    # NOTE: downstream consumers that only argmax/NLL over the first O lanes can
    # take out_padded directly and skip this post-slice HBM pass.
    return out_padded[:B, :O]


def reference_forward(feats, channel_weight_logits, w1, b1, w2, b2):
    """Pure-JAX f32 reference mirroring the PyTorch forward."""
    B, C, E = feats.shape
    w = jax.nn.softmax(channel_weight_logits)                       # (4,)
    weighted = feats * w[None, :, None]                             # (B, 4, E)
    combined = weighted.reshape(B, C * E)                           # (B, 4E)
    h = jnp.maximum(combined @ w1 + b1, 0.0)                        # (B, H)
    logits = h @ w2 + b2                                            # (B, O)
    return jax.nn.log_softmax(logits, axis=1)


if __name__ == "__main__":
    # Small shapes consistent with the module (embedding_dim, hidden_dim, output_dim).
    B, E, H, O = 32, 128, 32, 3

    key = jax.random.PRNGKey(0)
    k_feats, k_w1, k_b1, k_w2, k_b2 = jax.random.split(key, 5)

    # TODO(synk): the text -> embedding step (sentence_transformer.encode) has no
    # Pallas equivalent; the kernel starts from precomputed per-channel embeddings.
    feats = jax.random.normal(k_feats, (B, NUM_CHANNELS, E), dtype=jnp.float32)

    channel_weight_logits = jnp.ones((NUM_CHANNELS,), dtype=jnp.float32)  # torch.ones(4)
    w1 = jax.random.normal(k_w1, (NUM_CHANNELS * E, H), dtype=jnp.float32) * 0.02  # fc1.weight^T
    b1 = jax.random.normal(k_b1, (H,), dtype=jnp.float32) * 0.02                    # fc1.bias
    w2 = jax.random.normal(k_w2, (H, O), dtype=jnp.float32) * 0.02                  # fc2.weight^T
    b2 = jax.random.normal(k_b2, (O,), dtype=jnp.float32) * 0.02                    # fc2.bias

    # small block_batch so the demo actually exercises the batch grid (grid=(2,)),
    # while staying a multiple of 16 rows per tile.
    out = video_classifier_forward(feats, channel_weight_logits, w1, b1, w2, b2,
                                   block_batch=16)
    out = jax.block_until_ready(out)

    ref = reference_forward(feats, channel_weight_logits, w1, b1, w2, b2)
    assert out.shape == (B, O)
    # bf16 feature/weight streaming and bf16 output => looser tolerance vs f32 ref.
    assert jnp.allclose(out.astype(jnp.float32), ref, atol=2e-2, rtol=2e-2), \
        "mismatch vs reference"

    print("KERNEL_OK")
</pallas_src>

<mosaic_0001>
module attributes {stable_mosaic.version = 11 : i64} {
  func.func @video_classifier_kernel(%arg0: i32, %arg1: memref<16x512xf32, #tpu.memory_space<vmem>>, %arg2: memref<512x32xbf16, #tpu.memory_space<vmem>>, %arg3: memref<1x32xf32, #tpu.memory_space<vmem>>, %arg4: memref<32x128xbf16, #tpu.memory_space<vmem>>, %arg5: memref<1x128xf32, #tpu.memory_space<vmem>>, %arg6: memref<16x128xbf16, #tpu.memory_space<vmem>>) attributes {dimension_semantics = [#tpu.dimension_semantics<parallel>], iteration_bounds = array<i64: 2>, scalar_prefetch = 0 : i64, scratch_operands = 0 : i64, tpu.core_type = #tpu.core_type<tc>, window_params = [{transform_indices = @transform_0, window_bounds = array<i64: 16, 512>}, {pipeline_mode = #tpu.pipeline_mode<synchronous>, transform_indices = @transform_1, window_bounds = array<i64: 512, 32>}, {pipeline_mode = #tpu.pipeline_mode<synchronous>, transform_indices = @transform_2, window_bounds = array<i64: 1, 32>}, {pipeline_mode = #tpu.pipeline_mode<synchronous>, transform_indices = @transform_3, window_bounds = array<i64: 32, 128>}, {pipeline_mode = #tpu.pipeline_mode<synchronous>, transform_indices = @transform_4, window_bounds = array<i64: 1, 128>}, {transform_indices = @transform_5, window_bounds = array<i64: 16, 128>}]} {
    %c0 = arith.constant 0 : index
    %c0_0 = arith.constant 0 : index
    %0 = vector.load %arg1[%c0, %c0_0] : memref<16x512xf32, #tpu.memory_space<vmem>>, vector<16x512xf32>
    %1 = arith.truncf %0 : vector<16x512xf32> to vector<16x512xbf16>
    %c0_1 = arith.constant 0 : index
    %c0_2 = arith.constant 0 : index
    %2 = vector.load %arg2[%c0_1, %c0_2] : memref<512x32xbf16, #tpu.memory_space<vmem>>, vector<512x32xbf16>
    %cst = arith.constant dense<0.000000e+00> : vector<16x32xf32>
    %3 = tpu.matmul %1, %2, %cst {dimension_numbers = #tpu.dot_dimension_numbers<[1], [0], [0], [1], [0, 0, 1, 1], [], []>} : vector<16x512xbf16>, vector<512x32xbf16>, vector<16x32xf32> -> vector<16x32xf32>
    %c0_3 = arith.constant 0 : index
    %c0_4 = arith.constant 0 : index
    %4 = vector.load %arg3[%c0_3, %c0_4] : memref<1x32xf32, #tpu.memory_space<vmem>>, vector<1x32xf32>
    %5 = vector.broadcast %4 : vector<1x32xf32> to vector<16x32xf32>
    %6 = arith.addf %3, %5 : vector<16x32xf32>
    %cst_5 = arith.constant 0.000000e+00 : f32
    %7 = vector.broadcast %cst_5 : f32 to vector<16x32xf32>
    %8 = arith.maximumf %6, %7 : vector<16x32xf32>
    %9 = arith.truncf %8 : vector<16x32xf32> to vector<16x32xbf16>
    %c0_6 = arith.constant 0 : index
    %c0_7 = arith.constant 0 : index
    %10 = vector.load %arg4[%c0_6, %c0_7] : memref<32x128xbf16, #tpu.memory_space<vmem>>, vector<32x128xbf16>
    %cst_8 = arith.constant dense<0.000000e+00> : vector<16x128xf32>
    %11 = tpu.matmul %9, %10, %cst_8 {dimension_numbers = #tpu.dot_dimension_numbers<[1], [0], [0], [1], [0, 0, 1, 1], [], []>} : vector<16x32xbf16>, vector<32x128xbf16>, vector<16x128xf32> -> vector<16x128xf32>
    %c0_9 = arith.constant 0 : index
    %c0_10 = arith.constant 0 : index
    %12 = vector.load %arg5[%c0_9, %c0_10] : memref<1x128xf32, #tpu.memory_space<vmem>>, vector<1x128xf32>
    %13 = vector.broadcast %12 : vector<1x128xf32> to vector<16x128xf32>
    %14 = arith.addf %11, %13 : vector<16x128xf32>
    %cst_11 = arith.constant dense<0xFF800000> : vector<16xf32>
    %15 = vector.multi_reduction <maximumf>, %14, %cst_11 [1] : vector<16x128xf32> to vector<16xf32>
    %16 = vector.shape_cast %15 : vector<16xf32> to vector<16x1xf32>
    %17 = vector.broadcast %16 : vector<16x1xf32> to vector<16x128xf32>
    %18 = arith.subf %14, %17 : vector<16x128xf32>
    %19 = math.exp %18 : vector<16x128xf32>
    %cst_12 = arith.constant dense<0.000000e+00> : vector<16xf32>
    %20 = vector.multi_reduction <add>, %19, %cst_12 [1] : vector<16x128xf32> to vector<16xf32>
    %21 = vector.shape_cast %20 : vector<16xf32> to vector<16x1xf32>
    %22 = math.log %21 : vector<16x1xf32>
    %23 = vector.broadcast %22 : vector<16x1xf32> to vector<16x128xf32>
    %24 = arith.subf %18, %23 : vector<16x128xf32>
    %25 = arith.truncf %24 : vector<16x128xf32> to vector<16x128xbf16>
    %c0_13 = arith.constant 0 : index
    %c0_14 = arith.constant 0 : index
    %26 = vector.load %arg6[%c0_13, %c0_14] : memref<16x128xbf16, #tpu.memory_space<vmem>>, vector<16x128xbf16>
    tpu.vector_store %arg6[%c0_13, %c0_14], %25 {strides = array<i32>} : memref<16x128xbf16, #tpu.memory_space<vmem>>, vector<16x128xbf16>,
    return
  }
  func.func @transform_0(%arg0: i32) -> (i32, i32) {
    %c0_i32 = arith.constant 0 : i32
    %c0_i32_0 = arith.constant 0 : i32
    return %arg0, %c0_i32 : i32, i32
  }
  func.func @transform_1(%arg0: i32) -> (i32, i32) {
    %c0_i32 = arith.constant 0 : i32
    %c0_i32_0 = arith.constant 0 : i32
    %c0_i32_1 = arith.constant 0 : i32
    return %c0_i32, %c0_i32_0 : i32, i32
  }
  func.func @transform_2(%arg0: i32) -> (i32, i32) {
    %c0_i32 = arith.constant 0 : i32
    %c0_i32_0 = arith.constant 0 : i32
    %c0_i32_1 = arith.constant 0 : i32
    return %c0_i32, %c0_i32_0 : i32, i32
  }
  func.func @transform_3(%arg0: i32) -> (i32, i32) {
    %c0_i32 = arith.constant 0 : i32
    %c0_i32_0 = arith.constant 0 : i32
    %c0_i32_1 = arith.constant 0 : i32
    return %c0_i32, %c0_i32_0 : i32, i32
  }
  func.func @transform_4(%arg0: i32) -> (i32, i32) {
    %c0_i32 = arith.constant 0 : i32
    %c0_i32_0 = arith.constant 0 : i32
    %c0_i32_1 = arith.constant 0 : i32
    return %c0_i32, %c0_i32_0 : i32, i32
  }
  func.func @transform_5(%arg0: i32) -> (i32, i32) {
    %c0_i32 = arith.constant 0 : i32
    %c0_i32_0 = arith.constant 0 : i32
    return %arg0, %c0_i32 : i32, i32
  }
}

</mosaic_0001>

<llo_original>
// kernel: video_classifier_forward.1
$region0: #{video_classifier_forward.1}
  #allocation0 [shape = 'u32[]', space=smem, size = 0x4, offset = 0x4, fixed_abs, tag = 'smem constant byte address 0x4 - core index']
  #allocation1 [shape = 'u32[144,128]{1,0:T(1,128)}', space=vmem, size = 0x12000, scoped, tag = 'internal scratch']
  %s0 = inlined_call_operand.vmem [shape: f32[32,512], index: 0, kind: input, shape index: {}]
  %s1 = inlined_call_operand.vmem [shape: bf16[512,32], index: 1, kind: input, shape index: {}]
  %s2 = inlined_call_operand.vmem [shape: f32[1,32], index: 2, kind: input, shape index: {}]
  %s3 = inlined_call_operand.vmem [shape: bf16[32,128], index: 3, kind: input, shape index: {}]
  %s4 = inlined_call_operand.vmem [shape: f32[1,128], index: 4, kind: input, shape index: {}]
  %s5 = inlined_call_operand.vmem [shape: bf16[32,128], index: 5, kind: output, shape index: {}]
  %s6 = sld [smem:[#allocation0]]
  $region53: #{video_classifier_forward.1} parent=0
    _
  %s8 = ssub.s32 1, %s6
  %s9 = scalar_select 0, %s8, %s6
  loop: start=0, step=1, limit=4
  $region2: #{video_classifier_forward.1} parent=0 // loop_pre_header
    _
  $region3: #{video_classifier_forward.1} parent=0 // loop_header
    %s11 = sphi 0, %s15
    %p12 = scmp.ge.s32.totalorder %s11, 4
    %s21 = sphi 0, %s23
    %s24 = sphi 0, %s21
    %s25 = sphi 0, %s24
    %s41 = sphi 0, %s25
    %s45 = sphi 0, %s45
    %s47 = sphi 0, %s45
    %s48 = sphi 0, %s47
    %s62 = sphi 0, %s48
    %s66 = sphi 0, %s66
    %s68 = sphi 0, %s66
    %s69 = sphi 0, %s68
    %s83 = sphi 0, %s69
    %s87 = sphi 0, %s87
    %s89 = sphi 0, %s87
    %s90 = sphi 0, %s89
    %s104 = sphi 0, %s90
    %s108 = sphi 0, %s108
    %s110 = sphi 0, %s108
    %s111 = sphi 0, %s110
    %s125 = sphi 0, %s111
    %s131 = sphi 0, %s133
    %s134 = sphi 0, %s131
    %s135 = sphi 0, %s134
    %s151 = sphi 0, %s135
  $region4: #{video_classifier_forward.1} parent=0 // loop_header_branch
    %14 = sbr.rel (%p12) target = $region8
  $region5: #{video_classifier_forward.1} parent=0 // loop_body
    %s16 = ssub.s32 %s11, 1
    %s17 = ssub.s32 %s11, 2
    %s18 = sadd.s32 %s11, 1
    %s19 = ssub.s32 %s11, %s18
    %p20 = scmp.eq.s32.totalorder %s19, 0
    %s22 = sadd.s32 %s21, 1
    %s23 = scalar_select %p20, %s21, %s22
    %p26 = pneg %p20
    %p27 = scmp.eq.s32.totalorder %s11, 1
    %p28 = por %p26, %p27
    %p29 = scmp.ne.s32.totalorder %s21, %s24
    %p30 = scmp.eq.s32.totalorder %s11, 0
    %p31 = por %p29, %p30
    %p32 = scmp.ne.s32.totalorder %s21, %s24
    %p33 = scmp.eq.s32.totalorder %s16, 1
    %p34 = por %p32, %p33
    %p35 = scmp.ne.s32.totalorder %s24, %s25
    %p36 = scmp.eq.s32.totalorder %s16, 0
    %p37 = por %p35, %p36
    %p38 = scmp.ne.s32.totalorder %s24, %s25
    %p39 = scmp.eq.s32.totalorder %s17, 1
    %p40 = por %p38, %p39
    %p42 = scmp.ne.s32.totalorder %s25, %s41
    %p43 = scmp.eq.s32.totalorder %s17, 0
    %p44 = por %p42, %p43
    %s46 = sadd.s32 %s45, 1
    %p49 = scmp.eq.s32.totalorder %s11, 1
    %p50 = scmp.ne.s32.totalorder %s45, %s47
    %p51 = scmp.eq.s32.totalorder %s11, 0
    %p52 = por %p50, %p51
    %p53 = scmp.ne.s32.totalorder %s45, %s47
    %p54 = scmp.eq.s32.totalorder %s16, 1
    %p55 = por %p53, %p54
    %p56 = scmp.ne.s32.totalorder %s47, %s48
    %p57 = scmp.eq.s32.totalorder %s16, 0
    %p58 = por %p56, %p57
    %p59 = scmp.ne.s32.totalorder %s47, %s48
    %p60 = scmp.eq.s32.totalorder %s17, 1
    %p61 = por %p59, %p60
    %p63 = scmp.ne.s32.totalorder %s48, %s62
    %p64 = scmp.eq.s32.totalorder %s17, 0
    %p65 = por %p63, %p64
    %s67 = sadd.s32 %s66, 1
    %p70 = scmp.eq.s32.totalorder %s11, 1
    %p71 = scmp.ne.s32.totalorder %s66, %s68
    %p72 = scmp.eq.s32.totalorder %s11, 0
    %p73 = por %p71, %p72
    %p74 = scmp.ne.s32.totalorder %s66, %s68
    %p75 = scmp.eq.s32.totalorder %s16, 1
    %p76 = por %p74, %p75
    %p77 = scmp.ne.s32.totalorder %s68, %s69
    %p78 = scmp.eq.s32.totalorder %s16, 0
    %p79 = por %p77, %p78
    %p80 = scmp.ne.s32.totalorder %s68, %s69
    %p81 = scmp.eq.s32.totalorder %s17, 1
    %p82 = por %p80, %p81
    %p84 = scmp.ne.s32.totalorder %s69, %s83
    %p85 = scmp.eq.s32.totalorder %s17, 0
    %p86 = por %p84, %p85
    %s88 = sadd.s32 %s87, 1
    %p91 = scmp.eq.s32.totalorder %s11, 1
    %p92 = scmp.ne.s32.totalorder %s87, %s89
    %p93 = scmp.eq.s32.totalorder %s11, 0
    %p94 = por %p92, %p93
    %p95 = scmp.ne.s32.totalorder %s87, %s89
    %p96 = scmp.eq.s32.totalorder %s16, 1
    %p97 = por %p95, %p96
    %p98 = scmp.ne.s32.totalorder %s89, %s90
    %p99 = scmp.eq.s32.totalorder %s16, 0
    %p100 = por %p98, %p99
    %p101 = scmp.ne.s32.totalorder %s89, %s90
    %p102 = scmp.eq.s32.totalorder %s17, 1
    %p103 = por %p101, %p102
    %p105 = scmp.ne.s32.totalorder %s90, %s104
    %p106 = scmp.eq.s32.totalorder %s17, 0
    %p107 = por %p105, %p106
    %s109 = sadd.s32 %s108, 1
    %p112 = scmp.eq.s32.totalorder %s11, 1
    %p113 = scmp.ne.s32.totalorder %s108, %s110
    %p114 = scmp.eq.s32.totalorder %s11, 0
    %p115 = por %p113, %p114
    %p116 = scmp.ne.s32.totalorder %s108, %s110
    %p117 = scmp.eq.s32.totalorder %s16, 1
    %p118 = por %p116, %p117
    %p119 = scmp.ne.s32.totalorder %s110, %s111
    %p120 = scmp.eq.s32.totalorder %s16, 0
    %p121 = por %p119, %p120
    %p122 = scmp.ne.s32.totalorder %s110, %s111
    %p123 = scmp.eq.s32.totalorder %s17, 1
    %p124 = por %p122, %p123
    %p126 = scmp.ne.s32.totalorder %s111, %s125
    %p127 = scmp.eq.s32.totalorder %s17, 0
    %p128 = por %p126, %p127
    %s129 = ssub.s32 %s11, %s18
    %p130 = scmp.eq.s32.totalorder %s129, 0
    %s132 = sadd.s32 %s131, 1
    %s133 = scalar_select %p130, %s131, %s132
    %p136 = pneg %p130
    %p137 = scmp.eq.s32.totalorder %s11, 1
    %p138 = por %p136, %p137
    %p139 = scmp.ne.s32.totalorder %s131, %s134
    %p140 = scmp.eq.s32.totalorder %s11, 0
    %p141 = por %p139, %p140
    %p142 = scmp.ne.s32.totalorder %s131, %s134
    %p143 = scmp.eq.s32.totalorder %s16, 1
    %p144 = por %p142, %p143
    %p145 = scmp.ne.s32.totalorder %s134, %s135
    %p146 = scmp.eq.s32.totalorder %s16, 0
    %p147 = por %p145, %p146
    %p148 = scmp.ne.s32.totalorder %s134, %s135
    %p149 = scmp.eq.s32.totalorder %s17, 1
    %p150 = por %p148, %p149
    %p152 = scmp.ne.s32.totalorder %s135, %s151
    %p153 = scmp.eq.s32.totalorder %s17, 0
    %p154 = por %p152, %p153
    %p155 = scmp.le.s32.totalorder 1, %s11
    %p156 = scmp.lt.s32.totalorder %s11, 3
    %p157 = pnand %p155, %p156
    %p158 = pneg %p157
    // Predicated region
    $region9: #{video_classifier_forward.1} parent=5 // pred_check
      _
    $region10: #{video_classifier_forward.1} parent=5 // pred_check_branch
      %160 = sbr.rel (%p157) target = $region12
    $region11: #{video_classifier_forward.1} parent=5 // pred_region
      %s161 = ssub.s32 %s11, 1
      // Predicated region
      $region13: #{video_classifier_forward.1} parent=11 // pred_check
        %p162 = pneg %p58
      $region14: #{video_classifier_forward.1} parent=11 // pred_check_branch
        %164 = sbr.rel (%p162) target = $region16
      $region15: #{video_classifier_forward.1} parent=11 // pred_region
        _
      $region16: #{video_classifier_forward.1} parent=11 // pred_fallthru
        _
      // Predicated region
      $region17: #{video_classifier_forward.1} parent=11 // pred_check
        %p165 = pneg %p79
      $region18: #{video_classifier_forward.1} parent=11 // pred_check_branch
        %167 = sbr.rel (%p165) target = $region20
      $region19: #{video_classifier_forward.1} parent=11 // pred_region
        _
      $region20: #{video_classifier_forward.1} parent=11 // pred_fallthru
        _
      // Predicated region
      $region21: #{video_classifier_forward.1} parent=11 // pred_check
        %p168 = pneg %p100
      $region22: #{video_classifier_forward.1} parent=11 // pred_check_branch
        %170 = sbr.rel (%p168) target = $region24
      $region23: #{video_classifier_forward.1} parent=11 // pred_region
        _
      $region24: #{video_classifier_forward.1} parent=11 // pred_fallthru
        _
      // Predicated region
      $region25: #{video_classifier_forward.1} parent=11 // pred_check
        %p171 = pneg %p121
      $region26: #{video_classifier_forward.1} parent=11 // pred_check_branch
        %173 = sbr.rel (%p171) target = $region28
      $region27: #{video_classifier_forward.1} parent=11 // pred_region
        _
      $region28: #{video_classifier_forward.1} parent=11 // pred_fallthru
        _
    $region12: #{video_classifier_forward.1} parent=5 // pred_fallthru
      _
    %p174 = scmp.lt.s32.totalorder %s11, 2
    // Predicated region
    $region29: #{video_classifier_forward.1} parent=5 // pred_check
      %p175 = pneg %p174
    $region30: #{video_classifier_forward.1} parent=5 // pred_check_branch
      %177 = sbr.rel (%p175) target = $region32
    $region31: #{video_classifier_forward.1} parent=5 // pred_region
      // Predicated region
      $region33: #{video_classifier_forward.1} parent=31 // pred_check
        %p178 = pneg %p31
      $region34: #{video_classifier_forward.1} parent=31 // pred_check_branch
        %180 = sbr.rel (%p178) target = $region36
      $region35: #{video_classifier_forward.1} parent=31 // pred_region
        %s181 = smul.u32 2, %s11
        %p182 = scmp.lt.s32.totalorder %s181, 3
        %s183 = scalar_select %p182, %s181, 3
        %s184 = smul.addr %s183, 4
        %s185 = smul.addr %s184, 8
        %s186 = scalar_lea.vmem %s0, %s185
        %s187 = smul.u32 2, %s11
      $region36: #{video_classifier_forward.1} parent=31 // pred_fallthru
        _
    $region32: #{video_classifier_forward.1} parent=5 // pred_fallthru
      _
    %p188 = scmp.le.s32.totalorder 1, %s11
    %p189 = scmp.lt.s32.totalorder %s11, 3
    %p190 = pnand %p188, %p189
    %p191 = pneg %p190
    // Predicated region
    $region37: #{video_classifier_forward.1} parent=5 // pred_check
      _
    $region38: #{video_classifier_forward.1} parent=5 // pred_check_branch
      %193 = sbr.rel (%p190) target = $region40
    $region39: #{video_classifier_forward.1} parent=5 // pred_region
      %s194 = ssub.s32 %s11, 1
      %s195 = smul.u32 2, %s16
      %p196 = scmp.lt.s32.totalorder %s195, 3
      %s197 = scalar_select %p196, %s195, 3
      %s198 = smul.addr %s197, 4
      %s199 = smul.addr %s198, 8
      %s200 = scalar_lea.vmem %s0, %s199
      %p201 = pneg %p37
      %p202 = pneg %p34
      %p203 = pneg %p58
      %p204 = pneg %p55
      %p205 = pneg %p79
      %p206 = pneg %p76
      %p207 = pneg %p100
      %p208 = pneg %p97
      %p209 = pneg %p121
      %p210 = pneg %p118
      %p211 = pneg %p147
      %p212 = pneg %p144
      %s213 = smul.u32 2, %s16
      %p214 = scmp.lt.s32.totalorder %s213, 3
      %s215 = scalar_select %p214, %s213, 3
      %s216 = smul.addr %s215, 4
      %s217 = scalar_lea.vmem %s5, %s216
      %s218 = smul.u32 2, %s16
      %p219 = scmp.lt.s32.totalorder %s218, 3
      %s220 = scalar_select %p219, %s218, 3
      %s221 = smul.addr %s220, 4
      %s222 = smul.addr %s221, 8
      %s223 = scalar_lea.vmem %s0, %s222
      %s224 = smul.u32 2, %s16
      %s225 = smul.u32 2, %s16
      %p226 = scmp.lt.s32.totalorder %s225, 3
      %s227 = scalar_select %p226, %s225, 3
      %s228 = smul.addr %s227, 4
      %s229 = scalar_lea.vmem %s5, %s228
      %s230 = smul.u32 2, %s16
      %v232 = vld [vmem:[%s223] sm:$0xff]
      %v233 = vld [vmem:[%s223 + $0x8] sm:$0xff]
      %v234 = vld [vmem:[%s223 + $0x10] sm:$0xff]
      %v235 = vld [vmem:[%s223 + $0x18] sm:$0xff]
      %v236 = vld [vmem:[%s223 + $0x20] sm:$0xff]
      %v237 = vld [vmem:[%s223 + $0x28] sm:$0xff]
      %v238 = vld [vmem:[%s223 + $0x30] sm:$0xff]
      %v239 = vld [vmem:[%s223 + $0x38] sm:$0xff]
      %v240 = vpack.c.bf16 %v236, %v232
      %v241 = vpack.c.bf16 %v237, %v233
      %v242 = vpack.c.bf16 %v238, %v234
      %v243 = vpack.c.bf16 %v239, %v235
      %v244 = vld [vmem:[%s1] sm:$0xf]
      %v245 = vld [vmem:[%s1 + $0x4] sm:$0xf]
      %v246 = vld [vmem:[%s1 + $0x8] sm:$0xf]
      %v247 = vld [vmem:[%s1 + $0xc] sm:$0xf]
      %v248 = vld [vmem:[%s1 + $0x10] sm:$0xf]
      %v249 = vld [vmem:[%s1 + $0x14] sm:$0xf]
      %v250 = vld [vmem:[%s1 + $0x18] sm:$0xf]
      %v251 = vld [vmem:[%s1 + $0x1c] sm:$0xf]
      %v252 = vld [vmem:[%s1 + $0x20] sm:$0xf]
      %v253 = vld [vmem:[%s1 + $0x24] sm:$0xf]
      %v254 = vld [vmem:[%s1 + $0x28] sm:$0xf]
      %v255 = vld [vmem:[%s1 + $0x2c] sm:$0xf]
      %v256 = vld [vmem:[%s1 + $0x30] sm:$0xf]
      %v257 = vld [vmem:[%s1 + $0x34] sm:$0xf]
      %v258 = vld [vmem:[%s1 + $0x38] sm:$0xf]
      %v259 = vld [vmem:[%s1 + $0x3c] sm:$0xf]
      %v260 = vld [vmem:[%s1 + $0x40] sm:$0xf]
      %v261 = vld [vmem:[%s1 + $0x44] sm:$0xf]
      %v262 = vld [vmem:[%s1 + $0x48] sm:$0xf]
      %v263 = vld [vmem:[%s1 + $0x4c] sm:$0xf]
      %v264 = vld [vmem:[%s1 + $0x50] sm:$0xf]
      %v265 = vld [vmem:[%s1 + $0x54] sm:$0xf]
      %v266 = vld [vmem:[%s1 + $0x58] sm:$0xf]
      %v267 = vld [vmem:[%s1 + $0x5c] sm:$0xf]
      %v268 = vld [vmem:[%s1 + $0x60] sm:$0xf]
      %v269 = vld [vmem:[%s1 + $0x64] sm:$0xf]
      %v270 = vld [vmem:[%s1 + $0x68] sm:$0xf]
      %v271 = vld [vmem:[%s1 + $0x6c] sm:$0xf]
      %v272 = vld [vmem:[%s1 + $0x70] sm:$0xf]
      %v273 = vld [vmem:[%s1 + $0x74] sm:$0xf]
      %v274 = vld [vmem:[%s1 + $0x78] sm:$0xf]
      %v275 = vld [vmem:[%s1 + $0x7c] sm:$0xf]
      %v276 = vld [vmem:[%s1 + $0x80] sm:$0xf]
      %v277 = vld [vmem:[%s1 + $0x84] sm:$0xf]
      %v278 = vld [vmem:[%s1 + $0x88] sm:$0xf]
      %v279 = vld [vmem:[%s1 + $0x8c] sm:$0xf]
      %v280 = vld [vmem:[%s1 + $0x90] sm:$0xf]
      %v281 = vld [vmem:[%s1 + $0x94] sm:$0xf]
      %v282 = vld [vmem:[%s1 + $0x98] sm:$0xf]
      %v283 = vld [vmem:[%s1 + $0x9c] sm:$0xf]
      %v284 = vld [vmem:[%s1 + $0xa0] sm:$0xf]
      %v285 = vld [vmem:[%s1 + $0xa4] sm:$0xf]
      %v286 = vld [vmem:[%s1 + $0xa8] sm:$0xf]
      %v287 = vld [vmem:[%s1 + $0xac] sm:$0xf]
      %v288 = vld [vmem:[%s1 + $0xb0] sm:$0xf]
      %v289 = vld [vmem:[%s1 + $0xb4] sm:$0xf]
      %v290 = vld [vmem:[%s1 + $0xb8] sm:$0xf]
      %v291 = vld [vmem:[%s1 + $0xbc] sm:$0xf]
      %v292 = vld [vmem:[%s1 + $0xc0] sm:$0xf]
      %v293 = vld [vmem:[%s1 + $0xc4] sm:$0xf]
      %v294 = vld [vmem:[%s1 + $0xc8] sm:$0xf]
      %v295 = vld [vmem:[%s1 + $0xcc] sm:$0xf]
      %v296 = vld [vmem:[%s1 + $0xd0] sm:$0xf]
      %v297 = vld [vmem:[%s1 + $0xd4] sm:$0xf]
      %v298 = vld [vmem:[%s1 + $0xd8] sm:$0xf]
      %v299 = vld [vmem:[%s1 + $0xdc] sm:$0xf]
      %v300 = vld [vmem:[%s1 + $0xe0] sm:$0xf]
      %v301 = vld [vmem:[%s1 + $0xe4] sm:$0xf]
      %v302 = vld [vmem:[%s1 + $0xe8] sm:$0xf]
      %v303 = vld [vmem:[%s1 + $0xec] sm:$0xf]
      %v304 = vld [vmem:[%s1 + $0xf0] sm:$0xf]
      %v305 = vld [vmem:[%s1 + $0xf4] sm:$0xf]
      %v306 = vld [vmem:[%s1 + $0xf8] sm:$0xf]
      %v307 = vld [vmem:[%s1 + $0xfc] sm:$0xf]
      %v308 = vld [vmem:[%s2] sm:$0x1]
      %v310 = vlaneseq
      %v311 = vshrl.u32 %v310, 7
      %v312 = vsub.s32 0, %v311
      %v313 = vrot.slane %v308, %v312
      %v379 = vunpack.c.l.b16 %v244
      %v380 = vunpack.c.l.b16 %v245
      %v381 = vunpack.c.l.b16 %v246
      %v382 = vunpack.c.l.b16 %v247
      %v383 = vunpack.c.l.b16 %v248
      %v384 = vunpack.c.l.b16 %v249
      %v385 = vunpack.c.l.b16 %v250
      %v386 = vunpack.c.l.b16 %v251
      %v387 = vunpack.c.l.b16 %v252
      %v388 = vunpack.c.l.b16 %v253
      %v389 = vunpack.c.l.b16 %v254
      %v390 = vunpack.c.l.b16 %v255
      %v391 = vunpack.c.l.b16 %v256
      %v392 = vunpack.c.l.b16 %v257
      %v393 = vunpack.c.l.b16 %v258
      %v394 = vunpack.c.l.b16 %v259
      %v395 = vunpack.c.l.b16 %v260
      %v396 = vunpack.c.l.b16 %v261
      %v397 = vunpack.c.l.b16 %v262
      %v398 = vunpack.c.l.b16 %v263
      %v399 = vunpack.c.l.b16 %v264
      %v400 = vunpack.c.l.b16 %v265
      %v401 = vunpack.c.l.b16 %v266
      %v402 = vunpack.c.l.b16 %v267
      %v403 = vunpack.c.l.b16 %v268
      %v404 = vunpack.c.l.b16 %v269
      %v405 = vunpack.c.l.b16 %v270
      %v406 = vunpack.c.l.b16 %v271
      %v407 = vunpack.c.l.b16 %v272
      %v408 = vunpack.c.l.b16 %v273
      %v409 = vunpack.c.l.b16 %v274
      %v410 = vunpack.c.l.b16 %v275
      %v411 = vunpack.c.l.b16 %v276
      %v412 = vunpack.c.l.b16 %v277
      %v413 = vunpack.c.l.b16 %v278
      %v414 = vunpack.c.l.b16 %v279
      %v415 = vunpack.c.l.b16 %v280
      %v416 = vunpack.c.l.b16 %v281
      %v417 = vunpack.c.l.b16 %v282
      %v418 = vunpack.c.l.b16 %v283
      %v419 = vunpack.c.l.b16 %v284
      %v420 = vunpack.c.l.b16 %v285
      %v421 = vunpack.c.l.b16 %v286
      %v422 = vunpack.c.l.b16 %v287
      %v423 = vunpack.c.l.b16 %v288
      %v424 = vunpack.c.l.b16 %v289
      %v425 = vunpack.c.l.b16 %v290
      %v426 = vunpack.c.l.b16 %v291
      %v427 = vunpack.c.l.b16 %v292
      %v428 = vunpack.c.l.b16 %v293
      %v429 = vunpack.c.l.b16 %v294
      %v430 = vunpack.c.l.b16 %v295
      %v431 = vunpack.c.l.b16 %v296
      %v432 = vunpack.c.l.b16 %v297
      %v433 = vunpack.c.l.b16 %v298
      %v434 = vunpack.c.l.b16 %v299
      %v435 = vunpack.c.l.b16 %v300
      %v436 = vunpack.c.l.b16 %v301
      %v437 = vunpack.c.l.b16 %v302
      %v438 = vunpack.c.l.b16 %v303
      %v439 = vunpack.c.l.b16 %v304
      %v440 = vunpack.c.l.b16 %v305
      %v441 = vunpack.c.l.b16 %v306
      %v442 = vunpack.c.l.b16 %v307
      %v443 = vpack.c.b16 %v380, %v379
      %v444 = vpack.c.b16 %v382, %v381
      %v445 = vpack.c.b16 %v384, %v383
      %v446 = vpack.c.b16 %v386, %v385
      %v447 = vpack.c.b16 %v388, %v387
      %v448 = vpack.c.b16 %v390, %v389
      %v449 = vpack.c.b16 %v392, %v391
      %v450 = vpack.c.b16 %v394, %v393
      %v451 = vpack.c.b16 %v396, %v395
      %v452 = vpack.c.b16 %v398, %v397
      %v453 = vpack.c.b16 %v400, %v399
      %v454 = vpack.c.b16 %v402, %v401
      %v455 = vpack.c.b16 %v404, %v403
      %v456 = vpack.c.b16 %v406, %v405
      %v457 = vpack.c.b16 %v408, %v407
      %v458 = vpack.c.b16 %v410, %v409
      %v459 = vpack.c.b16 %v412, %v411
      %v460 = vpack.c.b16 %v414, %v413
      %v461 = vpack.c.b16 %v416, %v415
      %v462 = vpack.c.b16 %v418, %v417
      %v463 = vpack.c.b16 %v420, %v419
      %v464 = vpack.c.b16 %v422, %v421
      %v465 = vpack.c.b16 %v424, %v423
      %v466 = vpack.c.b16 %v426, %v425
      %v467 = vpack.c.b16 %v428, %v427
      %v468 = vpack.c.b16 %v430, %v429
      %v469 = vpack.c.b16 %v432, %v431
      %v470 = vpack.c.b16 %v434, %v433
      %v471 = vpack.c.b16 %v436, %v435
      %v472 = vpack.c.b16 %v438, %v437
      %v473 = vpack.c.b16 %v440, %v439
      %v474 = vpack.c.b16 %v442, %v441
      %507 = vmatprep.subr.bf16.mxu0 0
      %508 = vmatpush1.bf16.msra.mxu0 %v450
      %509 = vmatprep.subr.bf16.mxu0 0
      %510 = vmatpush1.bf16.msra.mxu0 %v449
      %511 = vmatprep.subr.bf16.mxu0 0
      %512 = vmatpush1.bf16.msra.mxu0 %v448
      %513 = vmatprep.subr.bf16.mxu0 0
      %514 = vmatpush1.bf16.msra.mxu0 %v447
      %515 = vmatprep.subr.bf16.mxu0 0
      %516 = vmatpush1.bf16.msra.mxu0 %v446
      %517 = vmatprep.subr.bf16.mxu0 0
      %518 = vmatpush1.bf16.msra.mxu0 %v445
      %519 = vmatprep.subr.bf16.mxu0 0
      %520 = vmatpush1.bf16.msra.mxu0 %v444
      %521 = vmatprep.subr.bf16.mxu0 0
      %522 = vmatpush1.bf16.msra.mxu0 %v443
      %523 = vmatprep.subr.bf16.mxu0 0
      %524 = vmatpush2.bf16.msra.mxu0 %v458
      %525 = vmatprep.subr.bf16.mxu0 0
      %526 = vmatpush2.bf16.msra.mxu0 %v457
      %527 = vmatprep.subr.bf16.mxu0 0
      %528 = vmatpush2.bf16.msra.mxu0 %v456
      %529 = vmatprep.subr.bf16.mxu0 0
      %530 = vmatpush2.bf16.msra.mxu0 %v455
      %531 = vmatprep.subr.bf16.mxu0 0
      %532 = vmatpush2.bf16.msra.mxu0 %v454
      %533 = vmatprep.subr.bf16.mxu0 0
      %534 = vmatpush2.bf16.msra.mxu0 %v453
      %535 = vmatprep.subr.bf16.mxu0 0
      %536 = vmatpush2.bf16.msra.mxu0 %v452
      %537 = vmatprep.subr.bf16.mxu0 0
      %538 = vmatpush2.bf16.msra.mxu0 %v451
      %539 = vmatprep.mubr.bf16.mxu0 %v241
      %540 = vmatmul.mubr.bf16.gmra.mxu0 %v240
      %v541 = vpop.f32.mrf.mxu0
      %v542 = vadd.f32 %v313, %v541
      %v543 = vpop.f32.mrf.mxu0
      %v544 = vpop.f32.mrf.mxu0
      %v545 = vadd.f32 %v313, %v544
      %v546 = vpop.f32.mrf.mxu0
      %547 = vdwg.mxu0
      %548 = vmatprep.subr.bf16.mxu0 0
      %549 = vmatpush1.bf16.msra.mxu0 %v466
      %550 = vmatprep.subr.bf16.mxu0 0
      %551 = vmatpush1.bf16.msra.mxu0 %v465
      %552 = vmatprep.subr.bf16.mxu0 0
      %553 = vmatpush1.bf16.msra.mxu0 %v464
      %554 = vmatprep.subr.bf16.mxu0 0
      %555 = vmatpush1.bf16.msra.mxu0 %v463
      %556 = vmatprep.subr.bf16.mxu0 0
      %557 = vmatpush1.bf16.msra.mxu0 %v462
      %558 = vmatprep.subr.bf16.mxu0 0
      %559 = vmatpush1.bf16.msra.mxu0 %v461
      %560 = vmatprep.subr.bf16.mxu0 0
      %561 = vmatpush1.bf16.msra.mxu0 %v460
      %562 = vmatprep.subr.bf16.mxu0 0
      %563 = vmatpush1.bf16.msra.mxu0 %v459
      %564 = vmatprep.subr.bf16.mxu0 0
      %565 = vmatpush2.bf16.msra.mxu0 %v474
      %566 = vmatprep.subr.bf16.mxu0 0
      %567 = vmatpush2.bf16.msra.mxu0 %v473
      %568 = vmatprep.subr.bf16.mxu0 0
      %569 = vmatpush2.bf16.msra.mxu0 %v472
      %570 = vmatprep.subr.bf16.mxu0 0
      %571 = vmatpush2.bf16.msra.mxu0 %v471
      %572 = vmatprep.subr.bf16.mxu0 0
      %573 = vmatpush2.bf16.msra.mxu0 %v470
      %574 = vmatprep.subr.bf16.mxu0 0
      %575 = vmatpush2.bf16.msra.mxu0 %v469
      %576 = vmatprep.subr.bf16.mxu0 0
      %577 = vmatpush2.bf16.msra.mxu0 %v468
      %578 = vmatprep.subr.bf16.mxu0 0
      %579 = vmatpush2.bf16.msra.mxu0 %v467
      %580 = vmatprep.mubr.bf16.mxu0 %v243
      %581 = vmatmul.mubr.bf16.gmra.mxu0 %v242
      %v582 = vpop.f32.mrf.mxu0
      %v583 = vadd.f32 %v542, %v582
      %v584 = vpop.f32.mrf.mxu0
      %v585 = vpop.f32.mrf.mxu0
      %v586 = vadd.f32 %v545, %v585
      %v587 = vpop.f32.mrf.mxu0
      %588 = vdwg.mxu0
      %v589 = vmax.f32 %v583, 0.0
      %v590 = vmax.f32 %v586, 0.0
      %v591 = vpack.c.bf16 %v590, %v589
      %v592 = vld [vmem:[%s3] sm:$0xf]
      %v593 = vld [vmem:[%s3 + $0x4] sm:$0xf]
      %v594 = vld [vmem:[%s3 + $0x8] sm:$0xf]
      %v595 = vld [vmem:[%s3 + $0xc] sm:$0xf]
      %v596 = vld [vmem:[%s4] sm:$0x1]
      %v598 = vlaneseq
      %v599 = vshrl.u32 %v598, 7
      %v600 = vsub.s32 0, %v599
      %v601 = vrot.slane %v596, %v600
      %v607 = vunpack.c.l.b16 %v592
      %v608 = vunpack.c.l.b16 %v593
      %v609 = vunpack.c.l.b16 %v594
      %v610 = vunpack.c.l.b16 %v595
      %v611 = vpack.c.b16 %v608, %v607
      %v612 = vpack.c.b16 %v610, %v609
      %vm615 = vcmask 261120
      %v617 = vsel %vm615, %v591, 0
      %619 = vmatprep.subr.bf16.mxu0 0
      %620 = vmatpush1.bf16.msra.mxu0 0
      %621 = vmatprep.subr.bf16.mxu0 0
      %622 = vmatpush1.bf16.msra.mxu0 0
      %623 = vmatprep.subr.bf16.mxu0 0
      %624 = vmatpush1.bf16.msra.mxu0 0
      %625 = vmatprep.subr.bf16.mxu0 0
      %626 = vmatpush1.bf16.msra.mxu0 0
      %627 = vmatprep.subr.bf16.mxu0 0
      %628 = vmatpush1.bf16.msra.mxu0 0
      %629 = vmatprep.subr.bf16.mxu0 0
      %630 = vmatpush1.bf16.msra.mxu0 0
      %631 = vmatprep.subr.bf16.mxu0 0
      %632 = vmatpush1.bf16.msra.mxu0 %v612
      %633 = vmatprep.subr.bf16.mxu0 0
      %634 = vmatpush1.bf16.msra.mxu0 %v611
      %635 = vmatprep.subr.bf16.mxu0 0
      %636 = vmatpush2.bf16.msra.mxu0 0
      %637 = vmatprep.subr.bf16.mxu0 0
      %638 = vmatpush2.bf16.msra.mxu0 0
      %639 = vmatprep.subr.bf16.mxu0 0
      %640 = vmatpush2.bf16.msra.mxu0 0
      %641 = vmatprep.subr.bf16.mxu0 0
      %642 = vmatpush2.bf16.msra.mxu0 0
      %643 = vmatprep.subr.bf16.mxu0 0
      %644 = vmatpush2.bf16.msra.mxu0 0
      %645 = vmatprep.subr.bf16.mxu0 0
      %646 = vmatpush2.bf16.msra.mxu0 0
      %647 = vmatprep.subr.bf16.mxu0 0
      %648 = vmatpush2.bf16.msra.mxu0 0
      %649 = vmatprep.subr.bf16.mxu0 0
      %650 = vmatpush2.bf16.msra.mxu0 0
      %651 = vmatprep.mubr.bf16.mxu0 0
      %652 = vmatmul.mubr.bf16.gmra.mxu0 %v617
      %v653 = vpop.f32.mrf.mxu0
      %v654 = vadd.f32 %v601, %v653
      %v655 = vpop.f32.mrf.mxu0
      %v656 = vpop.f32.mrf.mxu0
      %v657 = vadd.f32 %v601, %v656
      %v658 = vpop.f32.mrf.mxu0
      %659 = vdwg.mxu0
      %660 = vmax.xlane.f32.xlu0 %v654
      %v661 = vpop.xlane.xlu0 %660
      %662 = vmax.xlane.f32.xlu0 %v657
      %v663 = vpop.xlane.xlu0 %662
      %v664 = vsub.f32 %v654, %v661
      %v665 = vsub.f32 %v657, %v663
      %v666 = vmul.f32 %v664, 1.442695
      %v667 = vpow.pop %v666
      %v668 = vmul.f32 %v665, 1.442695
      %v669 = vpow.pop %v668
      %670 = vadd.xlane.f32.xlu0 %v667
      %v671 = vpop.xlane.xlu0 %670
      %672 = vadd.xlane.f32.xlu0 %v669
      %v673 = vpop.xlane.xlu0 %672
      %v674 = vlog2.pop %v671
      %v675 = vmul.f32 %v674, 0.6931472
      %v676 = vlog2.pop %v673
      %v677 = vmul.f32 %v676, 0.6931472
      %v678 = vsub.f32 %v664, %v675
      %v679 = vsub.f32 %v665, %v677
      %v680 = vpack.c.bf16 %v679, %v678
      %v682 = vunpack.c.l.b16 %v680
      %v683 = vunpack.c.h.b16 %v680
      %v684 = vpack.c.b16 %v682, %v682
      %v685 = vpack.c.b16 %v683, %v683
      %688 = vst [vmem:[%s229] sm:$0xf] %v684
      %689 = vst [vmem:[%s229 + $0x4] sm:$0xf] %v685
      %s690 = smul.u32 2, %s16
      %p691 = scmp.lt.s32.totalorder %s690, 3
      %s692 = scalar_select %p691, %s690, 3
      %s693 = smul.addr %s692, 4
      %s694 = scalar_lea.vmem %s5, %s693
      // Predicated region
      $region41: #{video_classifier_forward.1} parent=39 // pred_check
        %p695 = pneg %p144
      $region42: #{video_classifier_forward.1} parent=39 // pred_check_branch
        %697 = sbr.rel (%p695) target = $region44
      $region43: #{video_classifier_forward.1} parent=39 // pred_region
        %s698 = smul.u32 2, %s16
      $region44: #{video_classifier_forward.1} parent=39 // pred_fallthru
        _
    $region40: #{video_classifier_forward.1} parent=5 // pred_fallthru
      _
    %p699 = scmp.le.s32.totalorder 2, %s11
    // Predicated region
    $region45: #{video_classifier_forward.1} parent=5 // pred_check
      %p700 = pneg %p699
    $region46: #{video_classifier_forward.1} parent=5 // pred_check_branch
      %702 = sbr.rel (%p700) target = $region48
    $region47: #{video_classifier_forward.1} parent=5 // pred_region
      %s703 = ssub.s32 %s11, 2
      // Predicated region
      $region49: #{video_classifier_forward.1} parent=47 // pred_check
        %p704 = pneg %p150
      $region50: #{video_classifier_forward.1} parent=47 // pred_check_branch
        %706 = sbr.rel (%p704) target = $region52
      $region51: #{video_classifier_forward.1} parent=47 // pred_region
        %s707 = smul.u32 2, %s17
        %p708 = scmp.lt.s32.totalorder %s707, 3
        %s709 = scalar_select %p708, %s707, 3
        %s710 = smul.addr %s709, 4
        %s711 = scalar_lea.vmem %s5, %s710
      $region52: #{video_classifier_forward.1} parent=47 // pred_fallthru
        _
    $region48: #{video_classifier_forward.1} parent=5 // pred_fallthru
      _
  $region6: #{video_classifier_forward.1} parent=0 // loop_footer
    %s15 = sadd.s32 1, %s11
  $region7: #{video_classifier_forward.1} parent=0 // loop_footer_branch
    %10 = sbr.rel target = $region3
  $region8: #{video_classifier_forward.1} parent=0 // loop_exit
    _

</llo_original>
